<compile_context>
chip_gen: v6e
topology: v6e:2x2x1
jax: 0.10.0
libtpu: 0.0.40
codegen_flags: <defaults>
</compile_context>

<pallas_src>
import functools

import jax
import jax.numpy as jnp
from jax.experimental import pallas as pl
from jax.experimental.pallas import tpu as pltpu


# ---------------------------------------------------------------------------
# kernel
# ---------------------------------------------------------------------------
def elr_kernel(out_ref, tgt_ref, lab_ref, newt_ref, ce_ref, reg_ref, *,
               beta, num_real):
    logits = out_ref[...].astype(jnp.float32)            # (TB, Cp)
    tgt = tgt_ref[...].astype(jnp.float32)                # (TB, Cp) gathered rows
    lab = lab_ref[...]                                    # (TB, 1) int32

    tb, cp = logits.shape
    lane = jax.lax.broadcasted_iota(jnp.int32, (tb, cp), 1)
    real = lane < num_real                                 # mask for padded classes

    # numerically-stable softmax / logsumexp along the class (lane) axis
    m = jnp.max(logits, axis=-1, keepdims=True)
    shifted = logits - m
    expx = jnp.exp(shifted)
    sumexp = jnp.sum(expx, axis=-1, keepdims=True)
    lse = jnp.log(sumexp)                                  # (TB, 1)
    y_pred = expx * pl.reciprocal(sumexp)                  # exact reciprocal
    y_pred = jnp.clip(y_pred, 0.0001, 1.0 - 0.0001)        # torch.clamp(...)

    # cross-entropy with integer labels: logsumexp - logit[label]
    # (one-hot built on-chip; padded lanes contribute exactly 0)
    onehot = (lane == lab).astype(jnp.float32)
    ce_per = lse - jnp.sum(onehot * shifted, axis=-1, keepdims=True)   # (TB, 1)

    # running-target (history) EMA update:
    #   target[idx] = beta * target[idx] + (1-beta) * y_pred_ / y_pred_.sum(1)
    yp_hist = jnp.where(real, y_pred, 0.0)                 # drop padded lanes
    yp_hist = yp_hist * pl.reciprocal(
        jnp.sum(yp_hist, axis=-1, keepdims=True))
    new_t = beta * tgt + (1.0 - beta) * yp_hist            # padded lanes stay 0

    # elr_reg uses the *updated* target rows
    reg_per = jnp.log(1.0 - jnp.sum(new_t * y_pred, axis=-1, keepdims=True))

    newt_ref[...] = new_t.astype(newt_ref.dtype)
    # per-tile partial sums, broadcast to a lane-dense (1,8,128) tile
    ce_ref[...] = jnp.broadcast_to(jnp.sum(ce_per), ce_ref.shape)
    reg_ref[...] = jnp.broadcast_to(jnp.sum(reg_per), reg_ref.shape)


# ---------------------------------------------------------------------------
# wrapper
# ---------------------------------------------------------------------------
def _pick_tile_rows(batch, padded_classes):
    # Biggest batch tile that divides B and keeps (4 arrays x 2 pipeline
    # buffers x TB x Cp x 4B) comfortably inside a v7x-safe VMEM budget.
    budget = 12 * 1024 * 1024
    for tb in (1024, 512, 256, 128, 64, 32, 16, 8):
        if batch % tb == 0 and 8 * tb * padded_classes * 4 <= budget:
            return tb
    return batch


def elr_loss_forward(target, index, output, label, *, beta, lam,
                     tile_rows=None):
    """Functional equivalent of elr_loss.forward.

    Returns (final_loss scalar, updated target buffer)."""
    B, C = output.shape
    Cp = max(128, ((C + 127) // 128) * 128)                # lane-dense class dim
    pad_c = Cp - C
    if tile_rows is None:
        tile_rows = _pick_tile_rows(B, Cp)
    assert B % tile_rows == 0
    num_tiles = B // tile_rows

    # pad: -1e30 logits keep softmax exact; zero target rows keep EMA exact
    out_p = jnp.pad(output.astype(jnp.float32), ((0, 0), (0, pad_c)),
                    constant_values=-1e30)
    tgt_rows = jnp.pad(target[index].astype(jnp.float32), ((0, 0), (0, pad_c)))
    lab2d = label.astype(jnp.int32).reshape(B, 1)

    kernel = functools.partial(elr_kernel, beta=float(beta), num_real=C)

    new_t_p, ce_part, reg_part = pl.pallas_call(
        kernel,
        out_shape=(
            jax.ShapeDtypeStruct((B, Cp), jnp.float32),
            jax.ShapeDtypeStruct((num_tiles, 8, 128), jnp.float32),
            jax.ShapeDtypeStruct((num_tiles, 8, 128), jnp.float32),
        ),
        grid=(num_tiles,),
        in_specs=[
            pl.BlockSpec((tile_rows, Cp), lambda i: (i, 0)),
            pl.BlockSpec((tile_rows, Cp), lambda i: (i, 0)),
            pl.BlockSpec((tile_rows, 1), lambda i: (i, 0)),
        ],
        out_specs=(
            pl.BlockSpec((tile_rows, Cp), lambda i: (i, 0)),
            pl.BlockSpec((1, 8, 128), lambda i: (i, 0, 0)),
            pl.BlockSpec((1, 8, 128), lambda i: (i, 0, 0)),
        ),
        compiler_params=pltpu.CompilerParams(
            dimension_semantics=("parallel",),
            vmem_limit_bytes=32 * 1024 * 1024,
        ),
    )(out_p, tgt_rows, lab2d)

    # tiny host-side reductions + functional scatter of the state buffer
    new_rows = new_t_p[:, :C]
    new_target = target.at[index].set(new_rows.astype(target.dtype))
    ce_loss = jnp.sum(ce_part[:, 0, 0]) / B
    elr_reg = jnp.sum(reg_part[:, 0, 0]) / B
    final_loss = ce_loss + lam * elr_reg
    return final_loss, new_target


# ---------------------------------------------------------------------------
# pure-JAX reference (mirrors the PyTorch forward)
# ---------------------------------------------------------------------------
def ref_forward(target, index, output, label, *, beta, lam, num_classes):
    y_pred = jax.nn.softmax(output, axis=1)
    y_pred = jnp.clip(y_pred, 0.0001, 1.0 - 0.0001)
    y_pred_ = y_pred  # .data.detach(): identical forward values
    new_rows = beta * target[index] + (1.0 - beta) * (
        y_pred_ / jnp.sum(y_pred_, axis=1, keepdims=True))
    new_target = target.at[index].set(new_rows)
    log_sm = jax.nn.log_softmax(output, axis=1)
    onehot = jax.nn.one_hot(label, num_classes, dtype=jnp.float32)
    ce_loss = jnp.mean(-jnp.sum(onehot * log_sm, axis=1))     # F.cross_entropy
    elr_reg = jnp.mean(jnp.log(1.0 - jnp.sum(new_rows * y_pred, axis=1)))
    return ce_loss + lam * elr_reg, new_target


if __name__ == "__main__":
    # synthetic config matching the module defaults
    num_examp = 128
    num_classes = 10
    beta = 0.3
    lam = 3.0           # config['train_loss']['args']['lambda']
    B = 32

    key = jax.random.PRNGKey(0)
    k_idx, k_out, k_lab, k_tgt = jax.random.split(key, 4)

    # unique example indices (scatter order with duplicates is undefined in
    # both frameworks, so the test uses unique indices)
    index = jax.random.permutation(k_idx, num_examp)[:B]
    output = jax.random.normal(k_out, (B, num_classes), dtype=jnp.float32)
    label = jax.random.randint(k_lab, (B,), 0, num_classes, dtype=jnp.int32)

    # running prediction-history buffer (starts at zeros in the module; use a
    # normalized random state here to exercise the nonzero path)
    t_raw = jax.random.uniform(k_tgt, (num_examp, num_classes), dtype=jnp.float32)
    target = t_raw / jnp.sum(t_raw, axis=1, keepdims=True)

    # force several batch tiles so the grid pipeline is exercised
    loss, new_target = elr_loss_forward(target, index, output, label,
                                        beta=beta, lam=lam, tile_rows=8)
    loss = jax.block_until_ready(loss)
    new_target = jax.block_until_ready(new_target)

    loss_ref, new_target_ref = ref_forward(target, index, output, label,
                                           beta=beta, lam=lam,
                                           num_classes=num_classes)
    assert jnp.allclose(loss, loss_ref, rtol=1e-5, atol=1e-5), (loss, loss_ref)
    assert jnp.allclose(new_target, new_target_ref, rtol=1e-5, atol=1e-5)

    print("KERNEL_OK")
</pallas_src>

<mosaic_0001>
module attributes {stable_mosaic.version = 11 : i64} {
  func.func @elr_kernel(%arg0: i32, %arg1: memref<8x128xf32, #tpu.memory_space<vmem>>, %arg2: memref<8x128xf32, #tpu.memory_space<vmem>>, %arg3: memref<8x1xi32, #tpu.memory_space<vmem>>, %arg4: memref<8x128xf32, #tpu.memory_space<vmem>>, %arg5: memref<1x8x128xf32, #tpu.memory_space<vmem>>, %arg6: memref<1x8x128xf32, #tpu.memory_space<vmem>>) attributes {dimension_semantics = [#tpu.dimension_semantics<parallel>], iteration_bounds = array<i64: 4>, scalar_prefetch = 0 : i64, scratch_operands = 0 : i64, tpu.core_type = #tpu.core_type<tc>, window_params = [{transform_indices = @transform_0, window_bounds = array<i64: 8, 128>}, {transform_indices = @transform_1, window_bounds = array<i64: 8, 128>}, {transform_indices = @transform_2, window_bounds = array<i64: 8, 1>}, {transform_indices = @transform_3, window_bounds = array<i64: 8, 128>}, {transform_indices = @transform_4, window_bounds = array<i64: 1, 8, 128>}, {transform_indices = @transform_5, window_bounds = array<i64: 1, 8, 128>}]} {
    %c0 = arith.constant 0 : index
    %c0_0 = arith.constant 0 : index
    %0 = vector.load %arg1[%c0, %c0_0] : memref<8x128xf32, #tpu.memory_space<vmem>>, vector<8x128xf32>
    %c0_1 = arith.constant 0 : index
    %c0_2 = arith.constant 0 : index
    %1 = vector.load %arg2[%c0_1, %c0_2] : memref<8x128xf32, #tpu.memory_space<vmem>>, vector<8x128xf32>
    %c0_3 = arith.constant 0 : index
    %c0_4 = arith.constant 0 : index
    %2 = vector.load %arg3[%c0_3, %c0_4] : memref<8x1xi32, #tpu.memory_space<vmem>>, vector<8x1xi32>
    %3 = tpu.iota {dimensions = array<i32: 1>} : vector<8x128xi32>
    %c10_i32 = arith.constant 10 : i32
    %4 = vector.broadcast %c10_i32 : i32 to vector<8x128xi32>
    %5 = arith.cmpi slt, %3, %4 : vector<8x128xi32>
    %cst = arith.constant dense<0xFF800000> : vector<8xf32>
    %6 = vector.multi_reduction <maximumf>, %0, %cst [1] : vector<8x128xf32> to vector<8xf32>
    %7 = vector.shape_cast %6 : vector<8xf32> to vector<8x1xf32>
    %8 = vector.broadcast %7 : vector<8x1xf32> to vector<8x128xf32>
    %9 = arith.subf %0, %8 : vector<8x128xf32>
    %10 = math.exp %9 : vector<8x128xf32>
    %cst_5 = arith.constant dense<0.000000e+00> : vector<8xf32>
    %11 = vector.multi_reduction <add>, %10, %cst_5 [1] : vector<8x128xf32> to vector<8xf32>
    %12 = vector.shape_cast %11 : vector<8xf32> to vector<8x1xf32>
    %13 = math.log %12 : vector<8x1xf32>
    %14 = tpu.reciprocal %12 : vector<8x1xf32> -> vector<8x1xf32>
    %15 = vector.broadcast %14 : vector<8x1xf32> to vector<8x128xf32>
    %16 = arith.mulf %10, %15 : vector<8x128xf32>
    %cst_6 = arith.constant 9.99999974E-5 : f32
    %cst_7 = arith.constant 0.999899983 : f32
    %17 = vector.broadcast %cst_6 : f32 to vector<8x128xf32>
    %18 = arith.maximumf %17, %16 : vector<8x128xf32>
    %19 = vector.broadcast %cst_7 : f32 to vector<8x128xf32>
    %20 = arith.minimumf %19, %18 : vector<8x128xf32>
    %21 = vector.broadcast %2 : vector<8x1xi32> to vector<8x128xi32>
    %22 = arith.cmpi eq, %3, %21 : vector<8x128xi32>
    %23 = arith.extui %22 : vector<8x128xi1> to vector<8x128xi32>
    %24 = arith.sitofp %23 : vector<8x128xi32> to vector<8x128xf32>
    %25 = arith.mulf %24, %9 : vector<8x128xf32>
    %cst_8 = arith.constant dense<0.000000e+00> : vector<8xf32>
    %26 = vector.multi_reduction <add>, %25, %cst_8 [1] : vector<8x128xf32> to vector<8xf32>
    %27 = vector.shape_cast %26 : vector<8xf32> to vector<8x1xf32>
    %28 = arith.subf %13, %27 : vector<8x1xf32>
    %cst_9 = arith.constant 0.000000e+00 : f32
    %29 = vector.broadcast %cst_9 : f32 to vector<8x128xf32>
    %30 = arith.select %5, %20, %29 : vector<8x128xi1>, vector<8x128xf32>
    %cst_10 = arith.constant dense<0.000000e+00> : vector<8xf32>
    %31 = vector.multi_reduction <add>, %30, %cst_10 [1] : vector<8x128xf32> to vector<8xf32>
    %32 = vector.shape_cast %31 : vector<8xf32> to vector<8x1xf32>
    %33 = tpu.reciprocal %32 : vector<8x1xf32> -> vector<8x1xf32>
    %34 = vector.broadcast %33 : vector<8x1xf32> to vector<8x128xf32>
    %35 = arith.mulf %30, %34 : vector<8x128xf32>
    %cst_11 = arith.constant 3.000000e-01 : f32
    %36 = vector.broadcast %cst_11 : f32 to vector<8x128xf32>
    %37 = arith.mulf %36, %1 : vector<8x128xf32>
    %cst_12 = arith.constant 0.699999988 : f32
    %38 = vector.broadcast %cst_12 : f32 to vector<8x128xf32>
    %39 = arith.mulf %38, %35 : vector<8x128xf32>
    %40 = arith.addf %37, %39 : vector<8x128xf32>
    %41 = arith.mulf %40, %20 : vector<8x128xf32>
    %cst_13 = arith.constant dense<0.000000e+00> : vector<8xf32>
    %42 = vector.multi_reduction <add>, %41, %cst_13 [1] : vector<8x128xf32> to vector<8xf32>
    %43 = vector.shape_cast %42 : vector<8xf32> to vector<8x1xf32>
    %cst_14 = arith.constant 1.000000e+00 : f32
    %44 = vector.broadcast %cst_14 : f32 to vector<8x1xf32>
    %45 = arith.subf %44, %43 : vector<8x1xf32>
    %46 = math.log %45 : vector<8x1xf32>
    %c0_15 = arith.constant 0 : index
    %c0_16 = arith.constant 0 : index
    %47 = vector.load %arg4[%c0_15, %c0_16] : memref<8x128xf32, #tpu.memory_space<vmem>>, vector<8x128xf32>
    tpu.vector_store %arg4[%c0_15, %c0_16], %40 {strides = array<i32>} : memref<8x128xf32, #tpu.memory_space<vmem>>, vector<8x128xf32>,
    %48 = vector.shape_cast %28 : vector<8x1xf32> to vector<1x8x1xf32>
    %cst_17 = arith.constant dense<0.000000e+00> : vector<1xf32>
    %49 = vector.multi_reduction <add>, %48, %cst_17 [1, 2] : vector<1x8x1xf32> to vector<1xf32>
    %50 = vector.shape_cast %49 : vector<1xf32> to vector<1x1x1xf32>
    %51 = vector.extract %50[0, 0, 0] : f32 from vector<1x1x1xf32>
    %52 = vector.broadcast %51 : f32 to vector<1x8x128xf32>
    %c0_18 = arith.constant 0 : index
    %c0_19 = arith.constant 0 : index
    %c0_20 = arith.constant 0 : index
    %53 = vector.load %arg5[%c0_18, %c0_19, %c0_20] : memref<1x8x128xf32, #tpu.memory_space<vmem>>, vector<1x8x128xf32>
    tpu.vector_store %arg5[%c0_18, %c0_19, %c0_20], %52 {strides = array<i32>} : memref<1x8x128xf32, #tpu.memory_space<vmem>>, vector<1x8x128xf32>,
    %54 = vector.shape_cast %46 : vector<8x1xf32> to vector<1x8x1xf32>
    %cst_21 = arith.constant dense<0.000000e+00> : vector<1xf32>
    %55 = vector.multi_reduction <add>, %54, %cst_21 [1, 2] : vector<1x8x1xf32> to vector<1xf32>
    %56 = vector.shape_cast %55 : vector<1xf32> to vector<1x1x1xf32>
    %57 = vector.extract %56[0, 0, 0] : f32 from vector<1x1x1xf32>
    %58 = vector.broadcast %57 : f32 to vector<1x8x128xf32>
    %c0_22 = arith.constant 0 : index
    %c0_23 = arith.constant 0 : index
    %c0_24 = arith.constant 0 : index
    %59 = vector.load %arg6[%c0_22, %c0_23, %c0_24] : memref<1x8x128xf32, #tpu.memory_space<vmem>>, vector<1x8x128xf32>
    tpu.vector_store %arg6[%c0_22, %c0_23, %c0_24], %58 {strides = array<i32>} : memref<1x8x128xf32, #tpu.memory_space<vmem>>, vector<1x8x128xf32>,
    return
  }
  func.func @transform_0(%arg0: i32) -> (i32, i32) {
    %c0_i32 = arith.constant 0 : i32
    %c0_i32_0 = arith.constant 0 : i32
    return %arg0, %c0_i32 : i32, i32
  }
  func.func @transform_1(%arg0: i32) -> (i32, i32) {
    %c0_i32 = arith.constant 0 : i32
    %c0_i32_0 = arith.constant 0 : i32
    return %arg0, %c0_i32 : i32, i32
  }
  func.func @transform_2(%arg0: i32) -> (i32, i32) {
    %c0_i32 = arith.constant 0 : i32
    %c0_i32_0 = arith.constant 0 : i32
    return %arg0, %c0_i32 : i32, i32
  }
  func.func @transform_3(%arg0: i32) -> (i32, i32) {
    %c0_i32 = arith.constant 0 : i32
    %c0_i32_0 = arith.constant 0 : i32
    return %arg0, %c0_i32 : i32, i32
  }
  func.func @transform_4(%arg0: i32) -> (i32, i32, i32) {
    %c0_i32 = arith.constant 0 : i32
    %c0_i32_0 = arith.constant 0 : i32
    %c0_i32_1 = arith.constant 0 : i32
    return %arg0, %c0_i32, %c0_i32_0 : i32, i32, i32
  }
  func.func @transform_5(%arg0: i32) -> (i32, i32, i32) {
    %c0_i32 = arith.constant 0 : i32
    %c0_i32_0 = arith.constant 0 : i32
    %c0_i32_1 = arith.constant 0 : i32
    return %arg0, %c0_i32, %c0_i32_0 : i32, i32, i32
  }
}

</mosaic_0001>

<llo_original>
// kernel: tpu_custom_call.1
$region0: #{tpu_custom_call.1}
  #allocation0 [shape = 'u32[]', space=smem, size = 0x4, offset = 0x4, fixed_abs, tag = 'smem constant byte address 0x4 - core index']
  #allocation1 [shape = 'u32[144,128]{1,0:T(1,128)}', space=vmem, size = 0x12000, scoped, tag = 'internal scratch']
  %s0 = inlined_call_operand.vmem [shape: f32[32,128], index: 0, kind: input, shape index: {}]
  %s1 = inlined_call_operand.hbm [shape: f32[32,128], index: 1, kind: input, shape index: {}]
  %s2 = inlined_call_operand.vmem [shape: s32[32,1], index: 2, kind: input, shape index: {}]
  %s3 = inlined_call_operand.hbm [shape: f32[32,128], index: 3, kind: output, shape index: {0}]
  %s4 = inlined_call_operand.hbm [shape: f32[4,8,128], index: 4, kind: output, shape index: {1}]
  %s5 = inlined_call_operand.hbm [shape: f32[4,8,128], index: 5, kind: output, shape index: {2}]
  %6 = xla_tuple %s3, %s4, %s5
  %s7 = sld [smem:[#allocation0]]
  $region65: #{tpu_custom_call.1} parent=0
    _
  %s9 = ssub.s32 1, %s7
  %s10 = scalar_select 0, %s9, %s7
  $region1: #{tpu_custom_call.1} parent=0
    #allocation2 [shape = 'u8[8192]{0}', space=vmem, size = 0x2000, scoped, tag = 'input window, operand 1']
    #allocation3 [shape = 's32[2]{0}', space=sflag, size = 0x8, scoped, tag = 'scoped memory for tpu_custom_call.1']
    #allocation4 [shape = 's32[2]{0}', space=sflag, size = 0x8, scoped, tag = 'scoped memory for tpu_custom_call.1']
    #allocation5 [shape = 'u8[8192]{0}', space=vmem, size = 0x2000, scoped, tag = 'output window, operand 0']
    #allocation6 [shape = 'u8[8192]{0}', space=vmem, size = 0x2000, scoped, tag = 'output window, operand 1']
    #allocation7 [shape = 's32[2]{0}', space=sflag, size = 0x8, scoped, tag = 'scoped memory for tpu_custom_call.1']
    #allocation8 [shape = 'u8[8192]{0}', space=vmem, size = 0x2000, scoped, tag = 'output window, operand 2']
    %11 = vsyncpa [#allocation3], 0
    %s12 = scalar_lea.sflag [#allocation3], 1
    %13 = vsyncpa %s12, 0
    %14 = vsyncpa [#allocation4], 0
    %s15 = scalar_lea.sflag [#allocation4], 1
    %16 = vsyncpa %s15, 0
    %17 = vsyncpa [#allocation7], 0
    %s18 = scalar_lea.sflag [#allocation7], 1
    %19 = vsyncpa %s18, 0
    loop: start=0, step=1, limit=6
    $region2: #{tpu_custom_call.1} parent=1 // loop_pre_header
      _
    $region3: #{tpu_custom_call.1} parent=1 // loop_header
      %s21 = sphi 0, %s25
      %p22 = scmp.ge.s32.totalorder %s21, 6
      %s31 = sphi 0, %s33
      %s34 = sphi 0, %s31
      %s35 = sphi 0, %s34
      %s51 = sphi 0, %s35
      %s57 = sphi 0, %s59
      %s60 = sphi 0, %s57
      %s61 = sphi 0, %s60
      %s77 = sphi 0, %s61
      %s83 = sphi 0, %s85
      %s86 = sphi 0, %s83
      %s87 = sphi 0, %s86
      %s103 = sphi 0, %s87
      %s109 = sphi 0, %s111
      %s112 = sphi 0, %s109
      %s113 = sphi 0, %s112
      %s129 = sphi 0, %s113
      %s135 = sphi 0, %s137
      %s138 = sphi 0, %s135
      %s139 = sphi 0, %s138
      %s155 = sphi 0, %s139
      %s161 = sphi 0, %s163
      %s164 = sphi 0, %s161
      %s165 = sphi 0, %s164
      %s181 = sphi 0, %s165
    $region4: #{tpu_custom_call.1} parent=1 // loop_header_branch
      %24 = sbr.rel (%p22) target = $region8
    $region5: #{tpu_custom_call.1} parent=1 // loop_body
      %s26 = ssub.s32 %s21, 1
      %s27 = ssub.s32 %s21, 2
      %s28 = sadd.s32 %s21, 1
      %s29 = ssub.s32 %s21, %s28
      %p30 = scmp.eq.s32.totalorder %s29, 0
      %s32 = sadd.s32 %s31, 1
      %s33 = scalar_select %p30, %s31, %s32
      %p36 = pneg %p30
      %p37 = scmp.eq.s32.totalorder %s21, 3
      %p38 = por %p36, %p37
      %p39 = scmp.ne.s32.totalorder %s31, %s34
      %p40 = scmp.eq.s32.totalorder %s21, 0
      %p41 = por %p39, %p40
      %p42 = scmp.ne.s32.totalorder %s31, %s34
      %p43 = scmp.eq.s32.totalorder %s26, 3
      %p44 = por %p42, %p43
      %p45 = scmp.ne.s32.totalorder %s34, %s35
      %p46 = scmp.eq.s32.totalorder %s26, 0
      %p47 = por %p45, %p46
      %p48 = scmp.ne.s32.totalorder %s34, %s35
      %p49 = scmp.eq.s32.totalorder %s27, 3
      %p50 = por %p48, %p49
      %p52 = scmp.ne.s32.totalorder %s35, %s51
      %p53 = scmp.eq.s32.totalorder %s27, 0
      %p54 = por %p52, %p53
      %s55 = ssub.s32 %s21, %s28
      %p56 = scmp.eq.s32.totalorder %s55, 0
      %s58 = sadd.s32 %s57, 1
      %s59 = scalar_select %p56, %s57, %s58
      %p62 = pneg %p56
      %p63 = scmp.eq.s32.totalorder %s21, 3
      %p64 = por %p62, %p63
      %p65 = scmp.ne.s32.totalorder %s57, %s60
      %p66 = scmp.eq.s32.totalorder %s21, 0
      %p67 = por %p65, %p66
      %p68 = scmp.ne.s32.totalorder %s57, %s60
      %p69 = scmp.eq.s32.totalorder %s26, 3
      %p70 = por %p68, %p69
      %p71 = scmp.ne.s32.totalorder %s60, %s61
      %p72 = scmp.eq.s32.totalorder %s26, 0
      %p73 = por %p71, %p72
      %p74 = scmp.ne.s32.totalorder %s60, %s61
      %p75 = scmp.eq.s32.totalorder %s27, 3
      %p76 = por %p74, %p75
      %p78 = scmp.ne.s32.totalorder %s61, %s77
      %p79 = scmp.eq.s32.totalorder %s27, 0
      %p80 = por %p78, %p79
      %s81 = ssub.s32 %s21, %s28
      %p82 = scmp.eq.s32.totalorder %s81, 0
      %s84 = sadd.s32 %s83, 1
      %s85 = scalar_select %p82, %s83, %s84
      %p88 = pneg %p82
      %p89 = scmp.eq.s32.totalorder %s21, 3
      %p90 = por %p88, %p89
      %p91 = scmp.ne.s32.totalorder %s83, %s86
      %p92 = scmp.eq.s32.totalorder %s21, 0
      %p93 = por %p91, %p92
      %p94 = scmp.ne.s32.totalorder %s83, %s86
      %p95 = scmp.eq.s32.totalorder %s26, 3
      %p96 = por %p94, %p95
      %p97 = scmp.ne.s32.totalorder %s86, %s87
      %p98 = scmp.eq.s32.totalorder %s26, 0
      %p99 = por %p97, %p98
      %p100 = scmp.ne.s32.totalorder %s86, %s87
      %p101 = scmp.eq.s32.totalorder %s27, 3
      %p102 = por %p100, %p101
      %p104 = scmp.ne.s32.totalorder %s87, %s103
      %p105 = scmp.eq.s32.totalorder %s27, 0
      %p106 = por %p104, %p105
      %s107 = ssub.s32 %s21, %s28
      %p108 = scmp.eq.s32.totalorder %s107, 0
      %s110 = sadd.s32 %s109, 1
      %s111 = scalar_select %p108, %s109, %s110
      %p114 = pneg %p108
      %p115 = scmp.eq.s32.totalorder %s21, 3
      %p116 = por %p114, %p115
      %p117 = scmp.ne.s32.totalorder %s109, %s112
      %p118 = scmp.eq.s32.totalorder %s21, 0
      %p119 = por %p117, %p118
      %p120 = scmp.ne.s32.totalorder %s109, %s112
      %p121 = scmp.eq.s32.totalorder %s26, 3
      %p122 = por %p120, %p121
      %p123 = scmp.ne.s32.totalorder %s112, %s113
      %p124 = scmp.eq.s32.totalorder %s26, 0
      %p125 = por %p123, %p124
      %p126 = scmp.ne.s32.totalorder %s112, %s113
      %p127 = scmp.eq.s32.totalorder %s27, 3
      %p128 = por %p126, %p127
      %p130 = scmp.ne.s32.totalorder %s113, %s129
      %p131 = scmp.eq.s32.totalorder %s27, 0
      %p132 = por %p130, %p131
      %s133 = ssub.s32 %s21, %s28
      %p134 = scmp.eq.s32.totalorder %s133, 0
      %s136 = sadd.s32 %s135, 1
      %s137 = scalar_select %p134, %s135, %s136
      %p140 = pneg %p134
      %p141 = scmp.eq.s32.totalorder %s21, 3
      %p142 = por %p140, %p141
      %p143 = scmp.ne.s32.totalorder %s135, %s138
      %p144 = scmp.eq.s32.totalorder %s21, 0
      %p145 = por %p143, %p144
      %p146 = scmp.ne.s32.totalorder %s135, %s138
      %p147 = scmp.eq.s32.totalorder %s26, 3
      %p148 = por %p146, %p147
      %p149 = scmp.ne.s32.totalorder %s138, %s139
      %p150 = scmp.eq.s32.totalorder %s26, 0
      %p151 = por %p149, %p150
      %p152 = scmp.ne.s32.totalorder %s138, %s139
      %p153 = scmp.eq.s32.totalorder %s27, 3
      %p154 = por %p152, %p153
      %p156 = scmp.ne.s32.totalorder %s139, %s155
      %p157 = scmp.eq.s32.totalorder %s27, 0
      %p158 = por %p156, %p157
      %s159 = ssub.s32 %s21, %s28
      %p160 = scmp.eq.s32.totalorder %s159, 0
      %s162 = sadd.s32 %s161, 1
      %s163 = scalar_select %p160, %s161, %s162
      %p166 = pneg %p160
      %p167 = scmp.eq.s32.totalorder %s21, 3
      %p168 = por %p166, %p167
      %p169 = scmp.ne.s32.totalorder %s161, %s164
      %p170 = scmp.eq.s32.totalorder %s21, 0
      %p171 = por %p169, %p170
      %p172 = scmp.ne.s32.totalorder %s161, %s164
      %p173 = scmp.eq.s32.totalorder %s26, 3
      %p174 = por %p172, %p173
      %p175 = scmp.ne.s32.totalorder %s164, %s165
      %p176 = scmp.eq.s32.totalorder %s26, 0
      %p177 = por %p175, %p176
      %p178 = scmp.ne.s32.totalorder %s164, %s165
      %p179 = scmp.eq.s32.totalorder %s27, 3
      %p180 = por %p178, %p179
      %p182 = scmp.ne.s32.totalorder %s165, %s181
      %p183 = scmp.eq.s32.totalorder %s27, 0
      %p184 = por %p182, %p183
      %p185 = scmp.le.s32.totalorder 1, %s21
      %p186 = scmp.lt.s32.totalorder %s21, 5
      %p187 = pnand %p185, %p186
      %p188 = pneg %p187
      // Predicated region
      $region9: #{tpu_custom_call.1} parent=5 // pred_check
        _
      $region10: #{tpu_custom_call.1} parent=5 // pred_check_branch
        %190 = sbr.rel (%p187) target = $region12
      $region11: #{tpu_custom_call.1} parent=5 // pred_region
        %s191 = ssub.s32 %s21, 1
      $region12: #{tpu_custom_call.1} parent=5 // pred_fallthru
        _
      %p192 = scmp.lt.s32.totalorder %s21, 4
      // Predicated region
      $region13: #{tpu_custom_call.1} parent=5 // pred_check
        %p193 = pneg %p192
      $region14: #{tpu_custom_call.1} parent=5 // pred_check_branch
        %195 = sbr.rel (%p193) target = $region16
      $region15: #{tpu_custom_call.1} parent=5 // pred_region
        // Predicated region
        $region17: #{tpu_custom_call.1} parent=15 // pred_check
          %p196 = pneg %p41
        $region18: #{tpu_custom_call.1} parent=15 // pred_check_branch
          %198 = sbr.rel (%p196) target = $region20
        $region19: #{tpu_custom_call.1} parent=15 // pred_region
          %p199 = scmp.lt.s32.totalorder %s21, 3
          %s200 = scalar_select %p199, %s21, 3
          %s201 = smul.addr %s200, 8
          %s202 = scalar_lea.vmem %s0, %s201
        $region20: #{tpu_custom_call.1} parent=15 // pred_fallthru
          _
        // Predicated region
        $region21: #{tpu_custom_call.1} parent=15 // pred_check
          %p203 = pneg %p67
        $region22: #{tpu_custom_call.1} parent=15 // pred_check_branch
          %205 = sbr.rel (%p203) target = $region24
        $region23: #{tpu_custom_call.1} parent=15 // pred_region
          %s206 = sand.u32 %s57, 1
          %s207 = scalar_lea.sflag [#allocation3], %s206
          %s208 = sand.u32 %s57, 1
          %s209 = smul.addr %s208, 8
          %s210 = scalar_lea.vmem [#allocation2], %s209
          %s212 = ssub.s32 128, 128
          %213 = vsyncadd %s207, %s212
          %s214 = smul.addr %s21, 128
          %s215 = scalar_lea.hbm %s1, %s214
          %s217 = sshll.u32 %s210, 4
          %s218 = int_to_ptr.vmem [resolvable:$true] %s217
          %220 = dma.hbm_to_vmem [thread:$0]  %s215, 128, %s218, %s207
        $region24: #{tpu_custom_call.1} parent=15 // pred_fallthru
          _
        // Predicated region
        $region25: #{tpu_custom_call.1} parent=15 // pred_check
          %p221 = pneg %p93
        $region26: #{tpu_custom_call.1} parent=15 // pred_check_branch
          %223 = sbr.rel (%p221) target = $region28
        $region27: #{tpu_custom_call.1} parent=15 // pred_region
          %p224 = scmp.lt.s32.totalorder %s21, 3
          %s225 = scalar_select %p224, %s21, 3
          %s226 = smul.addr %s225, 8
          %s227 = scalar_lea.vmem %s2, %s226
        $region28: #{tpu_custom_call.1} parent=15 // pred_fallthru
          _
      $region16: #{tpu_custom_call.1} parent=5 // pred_fallthru
        _
      %p228 = scmp.le.s32.totalorder 1, %s21
      %p229 = scmp.lt.s32.totalorder %s21, 5
      %p230 = pnand %p228, %p229
      %p231 = pneg %p230
      // Predicated region
      $region29: #{tpu_custom_call.1} parent=5 // pred_check
        _
      $region30: #{tpu_custom_call.1} parent=5 // pred_check_branch
        %233 = sbr.rel (%p230) target = $region32
      $region31: #{tpu_custom_call.1} parent=5 // pred_region
        %s234 = ssub.s32 %s21, 1
        %s235 = sand.u32 %s60, 1
        %s236 = scalar_lea.sflag [#allocation3], %s235
        %s237 = sand.u32 %s60, 1
        %s238 = smul.addr %s237, 8
        %s239 = scalar_lea.vmem [#allocation2], %s238
        // Predicated region
        $region33: #{tpu_custom_call.1} parent=31 // pred_check
          %p240 = pneg %p73
        $region34: #{tpu_custom_call.1} parent=31 // pred_check_branch
          %242 = sbr.rel (%p240) target = $region36
        $region35: #{tpu_custom_call.1} parent=31 // pred_region
          %243 = dma.done %s236, 128
        $region36: #{tpu_custom_call.1} parent=31 // pred_fallthru
          _
        %p244 = scmp.lt.s32.totalorder %s26, 3
        %s245 = scalar_select %p244, %s26, 3
        %s246 = smul.addr %s245, 8
        %s247 = scalar_lea.vmem %s0, %s246
        %p248 = pneg %p47
        %p249 = pneg %p44
        %s250 = sand.u32 %s60, 1
        %s251 = scalar_lea.sflag [#allocation3], %s250
        %s252 = sand.u32 %s60, 1
        %s253 = smul.addr %s252, 8
        %s254 = scalar_lea.vmem [#allocation2], %s253
        %p255 = pneg %p73
        %p256 = pneg %p70
        %p257 = scmp.lt.s32.totalorder %s26, 3
        %s258 = scalar_select %p257, %s26, 3
        %s259 = smul.addr %s258, 8
        %s260 = scalar_lea.vmem %s2, %s259
        %p261 = pneg %p99
        %p262 = pneg %p96
        %p263 = pneg %p125
        %p264 = pneg %p122
        %s265 = sand.u32 %s112, 1
        %s266 = scalar_lea.sflag [#allocation4], %s265
        %s267 = sand.u32 %s112, 1
        %s268 = smul.addr %s267, 8
        %s269 = scalar_lea.vmem [#allocation5], %s268
        %p270 = pneg %p151
        %p271 = pneg %p148
        %s272 = sand.u32 %s26, 1
        %s273 = scalar_lea.sflag [#allocation7], %s272
        %s274 = sand.u32 %s138, 1
        %s275 = smul.addr %s274, 8
        %s276 = scalar_lea.vmem [#allocation6], %s275
        %p277 = pneg %p177
        %p278 = pneg %p174
        %s279 = sand.u32 %s26, 1
        %s280 = scalar_lea.sflag [#allocation7], %s279
        %s281 = sand.u32 %s164, 1
        %s282 = smul.addr %s281, 8
        %s283 = scalar_lea.vmem [#allocation8], %s282
        %p284 = scmp.lt.s32.totalorder %s26, 3
        %s285 = scalar_select %p284, %s26, 3
        %s286 = smul.addr %s285, 8
        %s287 = scalar_lea.vmem %s0, %s286
        %p288 = scmp.lt.s32.totalorder %s26, 3
        %s289 = scalar_select %p288, %s26, 3
        %s290 = smul.addr %s289, 8
        %s291 = scalar_lea.vmem %s2, %s290
        %v292 = vld [vmem:[%s287] sm:$0xff]
        %v293 = vld [vmem:[%s239] sm:$0xff]
        %v294 = vld [vmem:[%s291] sm:$0xff]
        %v295 = vlaneseq
        %v296 = vand.u32 %v295, 127
        %vm297 = vcmp.lt.s32.totalorder %v296, 10
        %298 = vmax.xlane.f32.xlu0 %v292
        %v299 = vpop.xlane.xlu0 %298
        %v300 = vsub.f32 %v292, %v299
        %v301 = vmul.f32 %v300, 1.442695
        %v302 = vpow.pop %v301
        %303 = vadd.xlane.f32.xlu0 %v302
        %v304 = vpop.xlane.xlu0 %303
        %v305 = vlog2.pop %v304
        %v306 = vmul.f32 %v305, 0.6931472
        %v307 = vrcp.pop %v304
        %v308 = vmul.f32 %v302, %v307
        %v309 = vmax.f32 %v308, 0.0001
        %v310 = vmin.f32 %v309, 0.9999
        %311 = vset.pattern.permute.xlu0 0
        %312 = vperm.xlu0 %311, %v294
        %v313 = vpop.permute.xlu0 %312
        %vm314 = vcmp.eq.s32.totalorder %v296, %v313
        %v315 = vsel %vm314, 1, 0
        %v316 = vcvt.s32.f32 %v315
        %v317 = vmul.f32 %v316, %v300
        %318 = vadd.xlane.f32.xlu0 %v317
        %v319 = vpop.xlane.xlu0 %318
        %v320 = vsub.f32 %v306, %v319
        %v321 = vsel %vm297, %v310, 0.0
        %322 = vadd.xlane.f32.xlu0 %v321
        %v323 = vpop.xlane.xlu0 %322
        %v324 = vrcp.pop %v323
        %v325 = vmul.f32 %v321, %v324
        %v326 = vmul.f32 %v293, 0.3
        %v327 = vmul.f32 %v325, 0.7
        %v328 = vadd.f32 %v326, %v327
        %v329 = vmul.f32 %v328, %v310
        %330 = vadd.xlane.f32.xlu0 %v329
        %v331 = vpop.xlane.xlu0 %330
        %v332 = vsub.f32 1.0, %v331
        %v333 = vlog2.pop %v332
        %v334 = vmul.f32 %v333, 0.6931472
        %335 = vst [vmem:[%s269] sm:$0xff] %v328
        %vm336 = vcmask 7168
        %v337 = vsel %vm336, %v320, 0.0
        %338 = vadd.xlane.f32.xlu0 %v337
        %v339 = vpop.xlane.xlu0 %338
        %v340 = vrot.slane %v339, 4
        %v341 = vadd.f32 %v339, %v340
        %v342 = vrot.slane %v341, 2
        %v343 = vadd.f32 %v341, %v342
        %v344 = vrot.slane %v343, 1
        %v345 = vadd.f32 %v343, %v344
        %s346 = vtos %v345
        %v347 = vstv %s346
        %348 = vst [vmem:[%s276] sm:$0xff] %v347
        %v349 = vsel %vm336, %v334, 0.0
        %350 = vadd.xlane.f32.xlu0 %v349
        %v351 = vpop.xlane.xlu0 %350
        %v352 = vrot.slane %v351, 4
        %v353 = vadd.f32 %v351, %v352
        %v354 = vrot.slane %v353, 2
        %v355 = vadd.f32 %v353, %v354
        %v356 = vrot.slane %v355, 1
        %v357 = vadd.f32 %v355, %v356
        %s358 = vtos %v357
        %v359 = vstv %s358
        %360 = vst [vmem:[%s283] sm:$0xff] %v359
        %s361 = sand.u32 %s112, 1
        %s362 = scalar_lea.sflag [#allocation4], %s361
        %s363 = sand.u32 %s112, 1
        %s364 = smul.addr %s363, 8
        %s365 = scalar_lea.vmem [#allocation5], %s364
        %s366 = sand.u32 %s26, 1
        %s367 = scalar_lea.sflag [#allocation7], %s366
        %s368 = sand.u32 %s138, 1
        %s369 = smul.addr %s368, 8
        %s370 = scalar_lea.vmem [#allocation6], %s369
        %s371 = sand.u32 %s26, 1
        %s372 = scalar_lea.sflag [#allocation7], %s371
        %s373 = sand.u32 %s164, 1
        %s374 = smul.addr %s373, 8
        %s375 = scalar_lea.vmem [#allocation8], %s374
        // Predicated region
        $region37: #{tpu_custom_call.1} parent=31 // pred_check
          %p376 = pneg %p122
        $region38: #{tpu_custom_call.1} parent=31 // pred_check_branch
          %378 = sbr.rel (%p376) target = $region40
        $region39: #{tpu_custom_call.1} parent=31 // pred_region
          %s380 = ssub.s32 128, 128
          %381 = vsyncadd %s362, %s380
          %s382 = smul.addr %s26, 128
          %s383 = scalar_lea.hbm %s3, %s382
          %s385 = sshll.u32 %s365, 4
          %s386 = int_to_ptr.vmem [resolvable:$true] %s385
          %388 = dma.vmem_to_hbm [thread:$0]  %s386, 128, %s383, %s362
        $region40: #{tpu_custom_call.1} parent=31 // pred_fallthru
          _
        // Predicated region
        $region41: #{tpu_custom_call.1} parent=31 // pred_check
          %p389 = pneg %p148
        $region42: #{tpu_custom_call.1} parent=31 // pred_check_branch
          %391 = sbr.rel (%p389) target = $region44
        $region43: #{tpu_custom_call.1} parent=31 // pred_region
          %s393 = ssub.s32 128, 128
          %394 = vsyncadd %s367, %s393
          %s395 = smul.addr %s26, 128
          %s396 = scalar_lea.hbm %s4, %s395
          %s398 = sshll.u32 %s370, 4
          %s399 = int_to_ptr.vmem [resolvable:$true] %s398
          %401 = dma.vmem_to_hbm [thread:$0]  %s399, 128, %s396, %s367
        $region44: #{tpu_custom_call.1} parent=31 // pred_fallthru
          _
        // Predicated region
        $region45: #{tpu_custom_call.1} parent=31 // pred_check
          %p402 = pneg %p174
        $region46: #{tpu_custom_call.1} parent=31 // pred_check_branch
          %404 = sbr.rel (%p402) target = $region48
        $region47: #{tpu_custom_call.1} parent=31 // pred_region
          %s406 = ssub.s32 128, 128
          %407 = vsyncadd %s372, %s406
          %s408 = smul.addr %s26, 128
          %s409 = scalar_lea.hbm %s5, %s408
          %s411 = sshll.u32 %s375, 4
          %s412 = int_to_ptr.vmem [resolvable:$true] %s411
          %414 = dma.vmem_to_hbm [thread:$0]  %s412, 128, %s409, %s372
        $region48: #{tpu_custom_call.1} parent=31 // pred_fallthru
          _
      $region32: #{tpu_custom_call.1} parent=5 // pred_fallthru
        _
      %p415 = scmp.le.s32.totalorder 2, %s21
      // Predicated region
      $region49: #{tpu_custom_call.1} parent=5 // pred_check
        %p416 = pneg %p415
      $region50: #{tpu_custom_call.1} parent=5 // pred_check_branch
        %418 = sbr.rel (%p416) target = $region52
      $region51: #{tpu_custom_call.1} parent=5 // pred_region
        %s419 = ssub.s32 %s21, 2
        // Predicated region
        $region53: #{tpu_custom_call.1} parent=51 // pred_check
          %p420 = pneg %p128
        $region54: #{tpu_custom_call.1} parent=51 // pred_check_branch
          %422 = sbr.rel (%p420) target = $region56
        $region55: #{tpu_custom_call.1} parent=51 // pred_region
          %s423 = sand.u32 %s113, 1
          %s424 = scalar_lea.sflag [#allocation4], %s423
          %s425 = sand.u32 %s113, 1
          %s426 = smul.addr %s425, 8
          %s427 = scalar_lea.vmem [#allocation5], %s426
          %428 = dma.done %s424, 128
        $region56: #{tpu_custom_call.1} parent=51 // pred_fallthru
          _
        // Predicated region
        $region57: #{tpu_custom_call.1} parent=51 // pred_check
          %p429 = pneg %p154
        $region58: #{tpu_custom_call.1} parent=51 // pred_check_branch
          %431 = sbr.rel (%p429) target = $region60
        $region59: #{tpu_custom_call.1} parent=51 // pred_region
          %s432 = sand.u32 %s27, 1
          %s433 = scalar_lea.sflag [#allocation7], %s432
          %s434 = sand.u32 %s139, 1
          %s435 = smul.addr %s434, 8
          %s436 = scalar_lea.vmem [#allocation6], %s435
          %437 = dma.done %s433, 128
        $region60: #{tpu_custom_call.1} parent=51 // pred_fallthru
          _
        // Predicated region
        $region61: #{tpu_custom_call.1} parent=51 // pred_check
          %p438 = pneg %p180
        $region62: #{tpu_custom_call.1} parent=51 // pred_check_branch
          %440 = sbr.rel (%p438) target = $region64
        $region63: #{tpu_custom_call.1} parent=51 // pred_region
          %s441 = sand.u32 %s27, 1
          %s442 = scalar_lea.sflag [#allocation7], %s441
          %s443 = sand.u32 %s165, 1
          %s444 = smul.addr %s443, 8
          %s445 = scalar_lea.vmem [#allocation8], %s444
          %446 = dma.done %s442, 128
        $region64: #{tpu_custom_call.1} parent=51 // pred_fallthru
          _
      $region52: #{tpu_custom_call.1} parent=5 // pred_fallthru
        _
    $region6: #{tpu_custom_call.1} parent=1 // loop_footer
      %s25 = sadd.s32 1, %s21
    $region7: #{tpu_custom_call.1} parent=1 // loop_footer_branch
      %20 = sbr.rel target = $region3
    $region8: #{tpu_custom_call.1} parent=1 // loop_exit
      _
    %447 = vsyncpa [#allocation3], 1
    %s448 = scalar_lea.sflag [#allocation3], 1
    %449 = vsyncpa %s448, 1
    %450 = vsyncpa [#allocation4], 1
    %s451 = scalar_lea.sflag [#allocation4], 1
    %452 = vsyncpa %s451, 1
    %453 = vsyncpa [#allocation7], 1
    %s454 = scalar_lea.sflag [#allocation7], 1
    %455 = vsyncpa %s454, 1

</llo_original>
